<compile_context>
chip_gen: v5e
topology: v5e:2x2
jax: 0.10.0
libtpu: 0.0.40
codegen_flags: <defaults>
</compile_context>

<pallas_src>
import functools

import jax
import jax.numpy as jnp
from jax.experimental import pallas as pl
from jax.experimental.pallas import tpu as pltpu


# ----------------------------------------------------------------------------
# Fused kernel (lane-dense: batch on lanes everywhere)
# ----------------------------------------------------------------------------

def _fused_postproc_kernel(logits_ref, num_ref, bin_ref,
                           probs_ref, cat_preds_ref, cat_prob_ref,
                           num_out_ref, bin_preds_ref,
                           *, mean, std, threshold):
    """All three output-feature postprocessors for one lane-dense batch tile.

    Batch lives on the LANE axis (last dim); the class axis C lives on
    sublanes.  Ref shapes (TB = batch tile, C = num classes):
      logits_ref    (C, TB)  f32   category logits (transposed)
      num_ref       (1, TB)  f32   number predictions
      bin_ref       (1, TB)  f32   binary probabilities
      probs_ref     (C, TB)  f32   category softmax (transposed)
      cat_preds_ref (1, TB)  i32   category argmax
      cat_prob_ref  (1, TB)  f32   category max probability
      num_out_ref   (1, TB)  f32   de-normalized number predictions
      bin_preds_ref (1, TB)  i32   thresholded binary predictions
    """
    # ---- category feature --------------------------------------------------
    logits = logits_ref[...]                                    # (C, TB)
    m = jnp.max(logits, axis=0, keepdims=True)                  # (1, TB) XLU sublane reduce
    e = jnp.exp(logits - m)                                     # EUP
    denom = jnp.sum(e, axis=0, keepdims=True)                   # (1, TB)
    # Exact reciprocal: the kernel is HBM-bound so the divide hides under DMA,
    # and probabilities then sum to 1 (no approx error vs torch softmax).
    inv = pl.reciprocal(denom, approx=False)                    # (1, TB)
    probs_ref[...] = e * inv                                     # softmax

    num_classes = logits.shape[0]
    cls_idx = jax.lax.broadcasted_iota(jnp.int32, logits.shape, 0)
    # First-occurrence argmax (matches torch.argmax): min class index attaining
    # the per-column max; equality with m is exact since m is an element.
    masked_idx = jnp.where(logits == m, cls_idx, jnp.int32(num_classes))
    cat_preds_ref[...] = jnp.min(masked_idx, axis=0, keepdims=True)
    # max(e) == exp(0) == 1 exactly, so the max probability is exactly inv.
    cat_prob_ref[...] = inv
    # TODO(synk): idx2str label lookup (string mapping) has no Pallas
    # equivalent; predictions are returned as integer class indices.

    # ---- number feature ----------------------------------------------------
    num_out_ref[...] = num_ref[...] * jnp.float32(std) + jnp.float32(mean)

    # ---- binary feature ----------------------------------------------------
    bin_preds_ref[...] = (bin_ref[...] >= jnp.float32(threshold)).astype(jnp.int32)
    # TODO(synk): bool2str label lookup has no Pallas equivalent; predictions
    # are returned as int32 {0, 1}.


# ----------------------------------------------------------------------------
# Tile sizing
# ----------------------------------------------------------------------------

def _choose_block_b(batch, num_classes, step_vmem_budget=12 * 1024 * 1024):
    """Batch tile for the pipelined path, sized from C and a VMEM budget."""
    # Per-row bytes for one grid step, double-buffered:
    #   inputs : logits C*4 + number 4 + binary 4
    #   outputs: probs  C*4 + preds 4 + prob 4 + number 4 + binary 4
    bytes_per_row = ((num_classes * 4 + 8) + (num_classes * 4 + 16)) * 2
    tb_cap = max(128, (step_vmem_budget // bytes_per_row) // 128 * 128)
    # Target ~4 grid steps: amortizes per-step overhead on every generation and
    # lets the "parallel" batch axis shard across both TensorCores on v7x.
    tb_target = ((batch + 3) // 4 + 127) // 128 * 128
    return max(128, min(tb_cap, tb_target))


# ----------------------------------------------------------------------------
# Fused wrapper (pallas_call glue)
# ----------------------------------------------------------------------------

def fused_postproc(logits, number_preds, binary_probs, *,
                   mean, std, threshold,
                   block_b=None, single_shot_bytes=16 * 1024 * 1024):
    """One pallas_call covering category + number + binary postprocessing."""
    B, C = logits.shape

    # Lane-dense host-side layouts (batch on lanes everywhere):
    #   logits (B, C) -> (C, B)    small host transpose (~B*C*4 bytes)
    #   number/binary (B, 1) -> (1, B)   free contiguous reshape
    logits_t = jnp.transpose(logits).astype(jnp.float32)        # (C, B)
    num_row = number_preds.reshape(1, B).astype(jnp.float32)
    bin_row = binary_probs.reshape(1, B).astype(jnp.float32)

    kernel = functools.partial(_fused_postproc_kernel,
                               mean=mean, std=std, threshold=threshold)

    out_shape = (
        jax.ShapeDtypeStruct((C, B), jnp.float32),   # category probs (transposed)
        jax.ShapeDtypeStruct((1, B), jnp.int32),     # category predictions
        jax.ShapeDtypeStruct((1, B), jnp.float32),   # category max probability
        jax.ShapeDtypeStruct((1, B), jnp.float32),   # number predictions
        jax.ShapeDtypeStruct((1, B), jnp.int32),     # binary predictions
    )

    # Advisory cost hint so XLA schedules/overlaps the call with neighbors.
    cost = pl.CostEstimate(
        flops=7 * B * C + 4 * B,
        transcendentals=B * C,
        bytes_accessed=B * (8 * C + 24),
    )

    total_resident_bytes = B * (8 * C + 24)
    if block_b is None and total_resident_bytes <= single_shot_bytes:
        # Everything (inputs + outputs) fits comfortably in VMEM on every
        # generation (v7x: 64 MiB physical): skip the pipeline entirely.
        # No grid -> no prologue/epilogue, no per-step overhead.
        vmem = pltpu.MemorySpace.VMEM
        outs = pl.pallas_call(
            kernel,
            in_specs=[pl.BlockSpec(memory_space=vmem)] * 3,
            out_specs=tuple(pl.BlockSpec(memory_space=vmem) for _ in out_shape),
            out_shape=out_shape,
            cost_estimate=cost,
        )(logits_t, num_row, bin_row)
    else:
        tb = block_b if block_b is not None else _choose_block_b(B, C)
        assert tb % 128 == 0, "batch tile must be a multiple of 128 (lane width)"
        grid = (pl.cdiv(B, tb),)
        # NOTE: when B % tb != 0 the tail step computes exp/argmax on
        # Pallas-padded (undefined) lanes; output writeback is masked so valid
        # lanes are unaffected -- intentional, do not add extra masking.
        outs = pl.pallas_call(
            kernel,
            grid=grid,
            in_specs=[
                pl.BlockSpec((C, tb), lambda i: (0, i)),
                pl.BlockSpec((1, tb), lambda i: (0, i)),
                pl.BlockSpec((1, tb), lambda i: (0, i)),
            ],
            out_specs=(
                pl.BlockSpec((C, tb), lambda i: (0, i)),
                pl.BlockSpec((1, tb), lambda i: (0, i)),
                pl.BlockSpec((1, tb), lambda i: (0, i)),
                pl.BlockSpec((1, tb), lambda i: (0, i)),
                pl.BlockSpec((1, tb), lambda i: (0, i)),
            ),
            out_shape=out_shape,
            cost_estimate=cost,
            compiler_params=pltpu.CompilerParams(
                # Batch tiles are independent -> shard across TensorCores on
                # v7x; a no-op (measured ~0%) on single-TC v5e/v6e.
                dimension_semantics=("parallel",),
                vmem_limit_bytes=32 * 1024 * 1024,
            ),
        )(logits_t, num_row, bin_row)

    probs_t, cat_preds, cat_prob, num_out, bin_preds = outs
    return {
        "category": {
            "probabilities": jnp.transpose(probs_t),   # back to (B, C) contract
            "predictions": cat_preds.reshape(B),
            "probability": cat_prob.reshape(B),
        },
        "number": {
            "predictions": num_out.reshape(B),
        },
        "binary": {
            "predictions": bin_preds.reshape(B),
            # Identity passthrough at the Python level: zero kernel I/O,
            # zero HBM traffic (cheaper than input_output_aliases).
            "probabilities": binary_probs,
        },
    }


# ----------------------------------------------------------------------------
# _InferencePostprocessor equivalent
# ----------------------------------------------------------------------------

def get_feature_concat_name(feature_name, key):
    return f"{feature_name}::{key}"


class InferencePostprocessor:
    """JAX/Pallas analog of ludwig's _InferencePostprocessor.

    The torch module routes a flattened dict of raw model outputs through one
    postprocessing module per output feature and flattens the results as
    '<feature_name>::<postproc_key>'.  Here the per-feature postprocessing of
    the representative model (category + number + binary output features) is
    fused into a single Pallas kernel launch; this class only performs the
    same dict routing as the torch module.
    """

    def __init__(self, training_set_metadata, block_b=None,
                 single_shot_bytes=16 * 1024 * 1024):
        num_meta = training_set_metadata["number_out"]
        bin_meta = training_set_metadata["binary_out"]
        self._mean = float(num_meta["mean"])
        self._std = float(num_meta["std"])
        self._threshold = float(bin_meta["threshold"])
        self._block_b = block_b
        self._single_shot_bytes = single_shot_bytes

    def forward(self, predictions_flattened):
        fused = fused_postproc(
            predictions_flattened["category_out::logits"],
            predictions_flattened["number_out::predictions"],
            predictions_flattened["binary_out::probabilities"],
            mean=self._mean, std=self._std, threshold=self._threshold,
            block_b=self._block_b, single_shot_bytes=self._single_shot_bytes,
        )
        feature_outputs = {
            "category_out": fused["category"],
            "number_out": fused["number"],
            "binary_out": fused["binary"],
        }
        postproc_outputs_flattened = {}
        for feature_name, outputs in feature_outputs.items():
            for postproc_key, tensor_values in outputs.items():
                concat_key = get_feature_concat_name(feature_name, postproc_key)
                postproc_outputs_flattened[concat_key] = tensor_values
        return postproc_outputs_flattened

    __call__ = forward


# ----------------------------------------------------------------------------
# Main
# ----------------------------------------------------------------------------

def _make_inputs(key, batch, num_classes):
    k1, k2, k3 = jax.random.split(key, 3)
    logits = jax.random.normal(k1, (batch, num_classes), dtype=jnp.float32)
    number_preds = jax.random.normal(k2, (batch, 1), dtype=jnp.float32)
    binary_probs = jax.nn.sigmoid(
        jax.random.normal(k3, (batch, 1), dtype=jnp.float32))
    return {
        "category_out::logits": logits,
        "number_out::predictions": number_preds,
        "binary_out::probabilities": binary_probs,
    }


def _check(outputs, inputs, mean, std, threshold):
    logits = inputs["category_out::logits"]
    number_preds = inputs["number_out::predictions"]
    binary_probs = inputs["binary_out::probabilities"]

    probs_ref = jax.nn.softmax(logits, axis=-1)
    # Exact reciprocal in-kernel -> only float32 rounding differences remain.
    assert jnp.allclose(outputs["category_out::probabilities"], probs_ref,
                        rtol=1e-5, atol=1e-6)
    assert jnp.array_equal(outputs["category_out::predictions"],
                           jnp.argmax(logits, axis=-1).astype(jnp.int32))
    assert jnp.allclose(outputs["category_out::probability"],
                        jnp.max(probs_ref, axis=-1), rtol=1e-5, atol=1e-6)
    assert jnp.allclose(outputs["number_out::predictions"],
                        number_preds.reshape(-1) * std + mean,
                        rtol=1e-5, atol=1e-5)
    assert jnp.array_equal(
        outputs["binary_out::predictions"],
        (binary_probs.reshape(-1) >= threshold).astype(jnp.int32))
    assert jnp.array_equal(outputs["binary_out::probabilities"], binary_probs)


if __name__ == "__main__":
    training_set_metadata = {
        "category_out": {},
        "number_out": {"mean": 3.0, "std": 2.0},
        "binary_out": {"threshold": 0.5},
    }

    key = jax.random.PRNGKey(0)
    k_small, k_large = jax.random.split(key)

    # Small batch: single-shot (no-grid) path.
    postproc = InferencePostprocessor(training_set_metadata)
    small_inputs = _make_inputs(k_small, batch=8, num_classes=16)
    small_out = postproc(small_inputs)

    # Moderate batch: still single-shot (fits the VMEM budget gate easily).
    large_inputs = _make_inputs(k_large, batch=1024, num_classes=16)
    large_out = postproc(large_inputs)

    # Force the tiled / megacore-parallel path on the same data to exercise it
    # (lane-dense blocks, 4 grid steps) without allocating a huge batch.
    postproc_tiled = InferencePostprocessor(
        training_set_metadata, block_b=256, single_shot_bytes=0)
    tiled_out = postproc_tiled(large_inputs)

    for out in (small_out, large_out, tiled_out):
        for v in out.values():
            jax.block_until_ready(v)

    _check(small_out, small_inputs, mean=3.0, std=2.0, threshold=0.5)
    _check(large_out, large_inputs, mean=3.0, std=2.0, threshold=0.5)
    _check(tiled_out, large_inputs, mean=3.0, std=2.0, threshold=0.5)

    print("KERNEL_OK")
</pallas_src>

<mosaic_0001>
module attributes {stable_mosaic.version = 11 : i64} {
  func.func @_fused_postproc_kernel(%arg0: memref<16x8xf32, #tpu.memory_space<vmem>>, %arg1: memref<1x8xf32, #tpu.memory_space<vmem>>, %arg2: memref<1x8xf32, #tpu.memory_space<vmem>>, %arg3: memref<16x8xf32, #tpu.memory_space<vmem>>, %arg4: memref<1x8xi32, #tpu.memory_space<vmem>>, %arg5: memref<1x8xf32, #tpu.memory_space<vmem>>, %arg6: memref<1x8xf32, #tpu.memory_space<vmem>>, %arg7: memref<1x8xi32, #tpu.memory_space<vmem>>) attributes {dimension_semantics = [], scalar_prefetch = 0 : i64, scratch_operands = 0 : i64, tpu.core_type = #tpu.core_type<tc>} {
    %c0 = arith.constant 0 : index
    %c0_0 = arith.constant 0 : index
    %0 = vector.load %arg0[%c0, %c0_0] : memref<16x8xf32, #tpu.memory_space<vmem>>, vector<16x8xf32>
    %cst = arith.constant dense<0xFF800000> : vector<8xf32>
    %1 = vector.multi_reduction <maximumf>, %0, %cst [0] : vector<16x8xf32> to vector<8xf32>
    %2 = vector.shape_cast %1 : vector<8xf32> to vector<1x8xf32>
    %3 = vector.broadcast %2 : vector<1x8xf32> to vector<16x8xf32>
    %4 = arith.subf %0, %3 : vector<16x8xf32>
    %5 = math.exp %4 : vector<16x8xf32>
    %cst_1 = arith.constant dense<0.000000e+00> : vector<8xf32>
    %6 = vector.multi_reduction <add>, %5, %cst_1 [0] : vector<16x8xf32> to vector<8xf32>
    %7 = vector.shape_cast %6 : vector<8xf32> to vector<1x8xf32>
    %8 = tpu.reciprocal %7 : vector<1x8xf32> -> vector<1x8xf32>
    %9 = vector.broadcast %8 : vector<1x8xf32> to vector<16x8xf32>
    %10 = arith.mulf %5, %9 : vector<16x8xf32>
    %c0_2 = arith.constant 0 : index
    %c0_3 = arith.constant 0 : index
    %11 = vector.load %arg3[%c0_2, %c0_3] : memref<16x8xf32, #tpu.memory_space<vmem>>, vector<16x8xf32>
    tpu.vector_store %arg3[%c0_2, %c0_3], %10 {strides = array<i32>} : memref<16x8xf32, #tpu.memory_space<vmem>>, vector<16x8xf32>,
    %12 = tpu.iota {dimensions = array<i32: 0>} : vector<16x8xi32>
    %13 = vector.broadcast %2 : vector<1x8xf32> to vector<16x8xf32>
    %14 = arith.cmpf oeq, %0, %13 : vector<16x8xf32>
    %c16_i32 = arith.constant 16 : i32
    %15 = vector.broadcast %c16_i32 : i32 to vector<16x8xi32>
    %16 = arith.select %14, %12, %15 : vector<16x8xi1>, vector<16x8xi32>
    %cst_4 = arith.constant dense<2147483647> : vector<8xi32>
    %17 = vector.multi_reduction <minsi>, %16, %cst_4 [0] : vector<16x8xi32> to vector<8xi32>
    %18 = vector.shape_cast %17 : vector<8xi32> to vector<1x8xi32>
    %c0_5 = arith.constant 0 : index
    %c0_6 = arith.constant 0 : index
    %19 = vector.load %arg4[%c0_5, %c0_6] : memref<1x8xi32, #tpu.memory_space<vmem>>, vector<1x8xi32>
    tpu.vector_store %arg4[%c0_5, %c0_6], %18 {strides = array<i32>} : memref<1x8xi32, #tpu.memory_space<vmem>>, vector<1x8xi32>,
    %c0_7 = arith.constant 0 : index
    %c0_8 = arith.constant 0 : index
    %20 = vector.load %arg5[%c0_7, %c0_8] : memref<1x8xf32, #tpu.memory_space<vmem>>, vector<1x8xf32>
    tpu.vector_store %arg5[%c0_7, %c0_8], %8 {strides = array<i32>} : memref<1x8xf32, #tpu.memory_space<vmem>>, vector<1x8xf32>,
    %c0_9 = arith.constant 0 : index
    %c0_10 = arith.constant 0 : index
    %21 = vector.load %arg1[%c0_9, %c0_10] : memref<1x8xf32, #tpu.memory_space<vmem>>, vector<1x8xf32>
    %cst_11 = arith.constant 2.000000e+00 : f32
    %22 = vector.broadcast %cst_11 : f32 to vector<1x8xf32>
    %23 = arith.mulf %21, %22 : vector<1x8xf32>
    %cst_12 = arith.constant 3.000000e+00 : f32
    %24 = vector.broadcast %cst_12 : f32 to vector<1x8xf32>
    %25 = arith.addf %23, %24 : vector<1x8xf32>
    %c0_13 = arith.constant 0 : index
    %c0_14 = arith.constant 0 : index
    %26 = vector.load %arg6[%c0_13, %c0_14] : memref<1x8xf32, #tpu.memory_space<vmem>>, vector<1x8xf32>
    tpu.vector_store %arg6[%c0_13, %c0_14], %25 {strides = array<i32>} : memref<1x8xf32, #tpu.memory_space<vmem>>, vector<1x8xf32>,
    %c0_15 = arith.constant 0 : index
    %c0_16 = arith.constant 0 : index
    %27 = vector.load %arg2[%c0_15, %c0_16] : memref<1x8xf32, #tpu.memory_space<vmem>>, vector<1x8xf32>
    %cst_17 = arith.constant 5.000000e-01 : f32
    %28 = vector.broadcast %cst_17 : f32 to vector<1x8xf32>
    %29 = arith.cmpf oge, %27, %28 : vector<1x8xf32>
    %30 = arith.extui %29 : vector<1x8xi1> to vector<1x8xi32>
    %c0_18 = arith.constant 0 : index
    %c0_19 = arith.constant 0 : index
    %31 = vector.load %arg7[%c0_18, %c0_19] : memref<1x8xi32, #tpu.memory_space<vmem>>, vector<1x8xi32>
    tpu.vector_store %arg7[%c0_18, %c0_19], %30 {strides = array<i32>} : memref<1x8xi32, #tpu.memory_space<vmem>>, vector<1x8xi32>,
    return
  }
}

</mosaic_0001>

<llo_original>
// kernel: tpu_custom_call.1
$region0: #{tpu_custom_call.1}
  #allocation0 [shape = 'u32[]', space=smem, size = 0x4, offset = 0x4, fixed_abs, tag = 'smem constant byte address 0x4 - core index']
  #allocation1 [shape = 'u32[72,128]{1,0:T(1,128)}', space=vmem, size = 0x9000, scoped, tag = 'internal scratch']
  %s0 = inlined_call_operand.vmem [shape: f32[16,8], index: 0, kind: input, shape index: {}]
  %s1 = inlined_call_operand.vmem [shape: f32[1,8], index: 1, kind: input, shape index: {}]
  %s2 = inlined_call_operand.vmem [shape: f32[1,8], index: 2, kind: input, shape index: {}]
  %s3 = inlined_call_operand.vmem [shape: f32[16,8], index: 3, kind: output, shape index: {0}]
  %s4 = inlined_call_operand.hbm [shape: s32[1,8], index: 4, kind: output, shape index: {1}]
  %s5 = inlined_call_operand.hbm [shape: f32[1,8], index: 5, kind: output, shape index: {2}]
  %s6 = inlined_call_operand.hbm [shape: f32[1,8], index: 6, kind: output, shape index: {3}]
  %s7 = inlined_call_operand.hbm [shape: s32[1,8], index: 7, kind: output, shape index: {4}]
  %8 = xla_tuple %s3, %s4, %s5, %s6, %s7
  %s9 = sld [smem:[#allocation0]]
  $region54: #{tpu_custom_call.1} parent=0
    _
  %s11 = ssub.s32 1, %s9
  %s12 = scalar_select 0, %s11, %s9
  $region1: #{tpu_custom_call.1} parent=0
    #allocation2 [shape = 'u8[512]{0}', space=vmem, size = 0x400, scoped, tag = 'output window, operand 1, single buffered']
    #allocation3 [shape = 's32[1]{0}', space=sflag, size = 0x4, scoped, tag = 'scoped memory for tpu_custom_call.1']
    #allocation4 [shape = 'u8[512]{0}', space=vmem, size = 0x400, scoped, tag = 'output window, operand 2, single buffered']
    #allocation5 [shape = 's32[1]{0}', space=sflag, size = 0x4, scoped, tag = 'scoped memory for tpu_custom_call.1']
    #allocation6 [shape = 'u8[512]{0}', space=vmem, size = 0x400, scoped, tag = 'output window, operand 3, single buffered']
    #allocation7 [shape = 'u8[512]{0}', space=vmem, size = 0x400, scoped, tag = 'output window, operand 4, single buffered']
    #allocation8 [shape = 's32[1]{0}', space=sflag, size = 0x4, scoped, tag = 'scoped memory for tpu_custom_call.1']
    %13 = vsyncpa [#allocation3], 0
    %14 = vsyncpa [#allocation5], 0
    %15 = vsyncpa [#allocation8], 0
    // Predicated region
    $region2: #{tpu_custom_call.1} parent=1 // pred_check
      _
    $region3: #{tpu_custom_call.1} parent=1 // pred_check_branch
      %17 = sbr.rel (0) target = $region5
    $region4: #{tpu_custom_call.1} parent=1 // pred_region
      _
    $region5: #{tpu_custom_call.1} parent=1 // pred_fallthru
      _
    // Predicated region
    $region6: #{tpu_custom_call.1} parent=1 // pred_check
      _
    $region7: #{tpu_custom_call.1} parent=1 // pred_check_branch
      %19 = sbr.rel (0) target = $region9
    $region8: #{tpu_custom_call.1} parent=1 // pred_region
      _
    $region9: #{tpu_custom_call.1} parent=1 // pred_fallthru
      _
    // Predicated region
    $region10: #{tpu_custom_call.1} parent=1 // pred_check
      _
    $region11: #{tpu_custom_call.1} parent=1 // pred_check_branch
      %21 = sbr.rel (0) target = $region13
    $region12: #{tpu_custom_call.1} parent=1 // pred_region
      _
    $region13: #{tpu_custom_call.1} parent=1 // pred_fallthru
      _
    %v22 = vld [vmem:[%s0] sm:$0xff]
    %v23 = vld [vmem:[%s0 + $0x8] sm:$0xff]
    %vm24 = vcmask 64512
    %v25 = vsel %vm24, %v22, -inf
    %v26 = vsel %vm24, %v23, -inf
    %v27 = vmax.f32 %v25, %v26
    %v28 = vrot.slane %v27, 4
    %v29 = vmax.f32 %v27, %v28
    %v30 = vrot.slane %v29, 2
    %v31 = vmax.f32 %v29, %v30
    %v32 = vrot.slane %v31, 1
    %v33 = vmax.f32 %v31, %v32
    %v34 = vsub.f32 %v22, %v33
    %v35 = vsub.f32 %v23, %v33
    %v36 = vmul.f32 %v34, 1.442695
    %v37 = vpow.pop %v36
    %v38 = vmul.f32 %v35, 1.442695
    %v39 = vpow.pop %v38
    %v40 = vsel %vm24, %v37, 0.0
    %v41 = vsel %vm24, %v39, 0.0
    %v42 = vadd.f32 %v40, %v41
    %v43 = vrot.slane %v42, 4
    %v44 = vadd.f32 %v42, %v43
    %v45 = vrot.slane %v44, 2
    %v46 = vadd.f32 %v44, %v45
    %v47 = vrot.slane %v46, 1
    %v48 = vadd.f32 %v46, %v47
    %v49 = vrcp.pop %v48
    %v50 = vmul.f32 %v48, %v49
    %v51 = vsub.f32 1.0, %v50
    %v52 = vmul.f32 %v49, %v51
    %v53 = vadd.f32 %v49, %v52
    %vm54 = vweird.f32 %v48
    %vm55 = vweird.f32 %v49
    %vm56 = vmor %vm54, %vm55
    %v57 = vsel %vm56, %v49, %v53
    %v58 = vand.u32 2147483647, %v48
    %vm59 = vcmp.eq.f32.partialorder %v58, 8.507059e+37
    %v60 = vand.u32 %v48, 2147483648
    %v61 = vor.u32 1.1754944e-38, %v60
    %v62 = vsel %vm59, %v61, %v57
    %v63 = vmul.f32 %v37, %v62
    %v64 = vmul.f32 %v39, %v62
    %65 = vst.msk [vmem:[%s3] sm:$0xff] %vm24, %v63
    %66 = vst.msk [vmem:[%s3 + $0x8] sm:$0xff] %vm24, %v64
    %v67 = vlaneseq
    %v68 = vshrl.u32 %v67, 7
    %v69 = vadd.s32 %v68, 8
    %vm70 = vcmp.eq.f32.partialorder %v22, %v33
    %vm71 = vcmp.eq.f32.partialorder %v23, %v33
    %v72 = vsel %vm70, %v68, 16
    %v73 = vsel %vm71, %v69, 16
    %v74 = vsel %vm24, %v72, 2147483647
    %v75 = vsel %vm24, %v73, 2147483647
    %vm76 = vcmp.lt.s32.totalorder %v74, %v75
    %v77 = vsel %vm76, %v74, %v75
    %v78 = vrot.slane %v77, 4
    %vm79 = vcmp.lt.s32.totalorder %v77, %v78
    %v80 = vsel %vm79, %v77, %v78
    %v81 = vrot.slane %v80, 2
    %vm82 = vcmp.lt.s32.totalorder %v80, %v81
    %v83 = vsel %vm82, %v80, %v81
    %v84 = vrot.slane %v83, 1
    %vm85 = vcmp.lt.s32.totalorder %v83, %v84
    %v86 = vsel %vm85, %v83, %v84
    %vm87 = vcmask 57344
    %88 = vst.msk [vmem:[#allocation2] sm:$0x1] %vm87, %v86
    %89 = vst.msk [vmem:[#allocation4] sm:$0x1] %vm87, %v62
    %v90 = vld [vmem:[%s1] sm:$0x1]
    %v91 = vmul.f32 %v90, 2.0
    %v92 = vadd.f32 %v91, 3.0
    %93 = vst.msk [vmem:[#allocation6] sm:$0x1] %vm87, %v92
    %v94 = vld [vmem:[%s2] sm:$0x1]
    %vm95 = vcmp.ge.f32.partialorder %v94, 0.5
    %v96 = vsel %vm95, 1, 0
    %97 = vst.msk [vmem:[#allocation7] sm:$0x1] %vm87, %v96
    // Predicated region
    $region14: #{tpu_custom_call.1} parent=1 // pred_check
      _
    $region15: #{tpu_custom_call.1} parent=1 // pred_check_branch
      %99 = sbr.rel (0) target = $region17
    $region16: #{tpu_custom_call.1} parent=1 // pred_region
      _
    $region17: #{tpu_custom_call.1} parent=1 // pred_fallthru
      _
    // Predicated region
    $region18: #{tpu_custom_call.1} parent=1 // pred_check
      _
    $region19: #{tpu_custom_call.1} parent=1 // pred_check_branch
      %101 = sbr.rel (0) target = $region21
    $region20: #{tpu_custom_call.1} parent=1 // pred_region
      %103 = vsyncadd [#allocation3], 0
      %s105 = sshll.u32 [#allocation2], 4
      %s106 = int_to_ptr.vmem [resolvable:$true] %s105
      %s107 = sshll.u32 %s4, 4
      %s108 = int_to_ptr.hbm [resolvable:$true] %s107
      %110 = dma.vmem_to_hbm [thread:$0]  %s106, 16, %s108, [#allocation3]
    $region21: #{tpu_custom_call.1} parent=1 // pred_fallthru
      _
    // Predicated region
    $region22: #{tpu_custom_call.1} parent=1 // pred_check
      _
    $region23: #{tpu_custom_call.1} parent=1 // pred_check_branch
      %112 = sbr.rel (0) target = $region25
    $region24: #{tpu_custom_call.1} parent=1 // pred_region
      %114 = vsyncadd [#allocation5], 0
      %s116 = sshll.u32 [#allocation4], 4
      %s117 = int_to_ptr.vmem [resolvable:$true] %s116
      %s118 = sshll.u32 %s5, 4
      %s119 = int_to_ptr.hbm [resolvable:$true] %s118
      %121 = dma.vmem_to_hbm [thread:$0]  %s117, 16, %s119, [#allocation5]
    $region25: #{tpu_custom_call.1} parent=1 // pred_fallthru
      _
    // Predicated region
    $region26: #{tpu_custom_call.1} parent=1 // pred_check
      _
    $region27: #{tpu_custom_call.1} parent=1 // pred_check_branch
      %123 = sbr.rel (0) target = $region29
    $region28: #{tpu_custom_call.1} parent=1 // pred_region
      %125 = vsyncadd [#allocation5], 0
      %s127 = sshll.u32 [#allocation6], 4
      %s128 = int_to_ptr.vmem [resolvable:$true] %s127
      %s129 = sshll.u32 %s6, 4
      %s130 = int_to_ptr.hbm [resolvable:$true] %s129
      %132 = dma.vmem_to_hbm [thread:$0]  %s128, 16, %s130, [#allocation5]
    $region29: #{tpu_custom_call.1} parent=1 // pred_fallthru
      _
    // Predicated region
    $region30: #{tpu_custom_call.1} parent=1 // pred_check
      _
    $region31: #{tpu_custom_call.1} parent=1 // pred_check_branch
      %134 = sbr.rel (0) target = $region33
    $region32: #{tpu_custom_call.1} parent=1 // pred_region
      %136 = vsyncadd [#allocation8], 0
      %s138 = sshll.u32 [#allocation7], 4
      %s139 = int_to_ptr.vmem [resolvable:$true] %s138
      %s140 = sshll.u32 %s7, 4
      %s141 = int_to_ptr.hbm [resolvable:$true] %s140
      %143 = dma.vmem_to_hbm [thread:$0]  %s139, 16, %s141, [#allocation8]
    $region33: #{tpu_custom_call.1} parent=1 // pred_fallthru
      _
    // Predicated region
    $region34: #{tpu_custom_call.1} parent=1 // pred_check
      _
    $region35: #{tpu_custom_call.1} parent=1 // pred_check_branch
      %145 = sbr.rel (0) target = $region37
    $region36: #{tpu_custom_call.1} parent=1 // pred_region
      _
    $region37: #{tpu_custom_call.1} parent=1 // pred_fallthru
      _
    // Predicated region
    $region38: #{tpu_custom_call.1} parent=1 // pred_check
      _
    $region39: #{tpu_custom_call.1} parent=1 // pred_check_branch
      %147 = sbr.rel (0) target = $region41
    $region40: #{tpu_custom_call.1} parent=1 // pred_region
      %149 = dma.done [#allocation3], 16
    $region41: #{tpu_custom_call.1} parent=1 // pred_fallthru
      _
    // Predicated region
    $region42: #{tpu_custom_call.1} parent=1 // pred_check
      _
    $region43: #{tpu_custom_call.1} parent=1 // pred_check_branch
      %151 = sbr.rel (0) target = $region45
    $region44: #{tpu_custom_call.1} parent=1 // pred_region
      %153 = dma.done [#allocation5], 16
    $region45: #{tpu_custom_call.1} parent=1 // pred_fallthru
      _
    // Predicated region
    $region46: #{tpu_custom_call.1} parent=1 // pred_check
      _
    $region47: #{tpu_custom_call.1} parent=1 // pred_check_branch
      %155 = sbr.rel (0) target = $region49
    $region48: #{tpu_custom_call.1} parent=1 // pred_region
      %157 = dma.done [#allocation5], 16
    $region49: #{tpu_custom_call.1} parent=1 // pred_fallthru
      _
    // Predicated region
    $region50: #{tpu_custom_call.1} parent=1 // pred_check
      _
    $region51: #{tpu_custom_call.1} parent=1 // pred_check_branch
      %159 = sbr.rel (0) target = $region53
    $region52: #{tpu_custom_call.1} parent=1 // pred_region
      %161 = dma.done [#allocation8], 16
    $region53: #{tpu_custom_call.1} parent=1 // pred_fallthru
      _
    %162 = vsyncpa [#allocation3], 1
    %163 = vsyncpa [#allocation5], 1
    %164 = vsyncpa [#allocation8], 1

</llo_original>
